<compile_context>
chip_gen: v6e
topology: v6e:2x2x1
jax: 0.10.0
libtpu: 0.0.40
codegen_flags: <defaults>
</compile_context>

<pallas_src>
import functools

import jax
import jax.numpy as jnp
from jax.experimental import pallas as pl
from jax.experimental.pallas import tpu as pltpu


_LANE = 128
_SUBLANE = 8
_VMEM_TILE_BUDGET = 30 * 1024 * 1024   # double-buffered tiles target
_VMEM_LIMIT_BYTES = 48 * 1024 * 1024   # scoped VMEM limit (safe on v5e/v6e/v7x)


def _round_up(x: int, m: int) -> int:
    return (x + m - 1) // m * m


def _choose_tile(dim: int, unit: int, cap: int) -> int:
    """Largest tile (multiple of `unit`, <= cap) with minimal padding."""
    d = _round_up(dim, unit)
    if d <= cap:
        return d
    cands = list(range(unit, cap + 1, unit))
    min_pad = min(_round_up(d, t) - d for t in cands)
    return max(t for t in cands if _round_up(d, t) - d == min_pad)


def _dropout_relu(y, seed_ref, row0, col0, *, dropout_p, training,
                  use_hw_prng, dout_logical):
    """Fused dropout (inverted scaling) + ReLU on an f32 (tm, tn) tile."""
    tm, tn = y.shape
    if training and dropout_p > 0.0:
        if dropout_p >= 1.0:
            y = jnp.zeros_like(y)
        else:
            if use_hw_prng:
                # Hardware PRNG, salted per tile (real TPU path).
                pltpu.prng_seed(seed_ref[0], row0, col0)
                bits = pltpu.bitcast(pltpu.prng_random_bits((tm, tn)),
                                     jnp.uint32)
            else:
                # Counter-based hash fallback (pure VPU int ops; runs anywhere).
                rows = jax.lax.broadcasted_iota(jnp.int32, (tm, tn), 0) + row0
                cols = jax.lax.broadcasted_iota(jnp.int32, (tm, tn), 1) + col0
                idx = (rows * dout_logical + cols).astype(jnp.uint32)
                h = idx * jnp.uint32(0x9E3779B9) + seed_ref[0].astype(jnp.uint32)
                h = h ^ (h >> 16)
                h = h * jnp.uint32(0x7FEB352D)
                h = h ^ (h >> 15)
                h = h * jnp.uint32(0x846CA68B)
                h = h ^ (h >> 16)
                bits = h
            threshold = jnp.uint32(int(dropout_p * (2 ** 32)))  # p < 1 here
            keep = bits >= threshold
            scale = jnp.float32(1.0 / (1.0 - dropout_p))
            y = jnp.where(keep, y * scale, 0.0)
    return jnp.maximum(y, 0.0)


def _basic_block_kernel_fused(seed_ref, x_ref, w_ref, b_ref, o_ref, *,
                              dropout_p, training, use_hw_prng,
                              dout_logical, tm, tn):
    """Single-pass kernel: whole (padded) Din contracted in one dot."""
    row0 = pl.program_id(0) * tm
    col0 = pl.program_id(1) * tn
    y = jnp.dot(x_ref[...], w_ref[...], preferred_element_type=jnp.float32)
    y = y + b_ref[...].astype(jnp.float32)
    y = _dropout_relu(y, seed_ref, row0, col0, dropout_p=dropout_p,
                      training=training, use_hw_prng=use_hw_prng,
                      dout_logical=dout_logical)
    o_ref[...] = y.astype(o_ref.dtype)


def _basic_block_kernel_ktiled(seed_ref, x_ref, w_ref, b_ref, o_ref, acc_ref, *,
                               dropout_p, training, use_hw_prng,
                               dout_logical, tm, tn):
    """K-tiled kernel with resident f32 accumulator (large Din fallback)."""
    k = pl.program_id(2)
    nk = pl.num_programs(2)
    # Hoisted out of pl.when bodies: program_id must be bound at the kernel top
    # level (the interpret fallback cannot substitute it inside cond branches).
    row0 = pl.program_id(0) * tm
    col0 = pl.program_id(1) * tn

    @pl.when(k == 0)
    def _():
        # Fold the bias add into the accumulator init (saves an epilogue add).
        acc_ref[...] = jnp.broadcast_to(b_ref[...].astype(jnp.float32), (tm, tn))

    acc_ref[...] += jnp.dot(x_ref[...], w_ref[...],
                            preferred_element_type=jnp.float32)

    @pl.when(k == nk - 1)
    def _():
        y = _dropout_relu(acc_ref[...], seed_ref, row0, col0,
                          dropout_p=dropout_p, training=training,
                          use_hw_prng=use_hw_prng, dout_logical=dout_logical)
        o_ref[...] = y.astype(o_ref.dtype)


def basic_block(x, weight, bias, *, dropout_p=0.25, training=True, seed=0,
                compute_dtype=jnp.bfloat16, use_hw_prng=None):
    """Forward of BasicBlock: ReLU(Dropout(x @ W.T + b)).

    x: (B, Din); weight: (Dout, Din) (PyTorch nn.Linear layout); bias: (Dout,).
    compute_dtype: MXU input dtype (default bf16; accumulation is always f32).
    """
    B, Din = x.shape
    Dout, Din_w = weight.shape
    assert Din_w == Din, "weight must be (Dout, Din)"

    out_dtype = x.dtype
    compute_dtype = x.dtype if compute_dtype is None else compute_dtype
    in_bytes = jnp.dtype(compute_dtype).itemsize
    out_bytes = jnp.dtype(out_dtype).itemsize

    if use_hw_prng is None:
        use_hw_prng = (jax.default_backend() == "tpu")

    # ---- tile selection (lane dims multiples of 128, VMEM-budgeted) ----
    tm = _choose_tile(B, _SUBLANE, 512)
    tn = _choose_tile(Dout, _LANE, 1024)

    def vmem_bytes(tk):
        # double-buffered x, w, bias, out + f32 accumulator
        return (2 * (tm * tk * in_bytes + tk * tn * in_bytes + tn * 4
                     + tm * tn * out_bytes) + tm * tn * 4)

    dinp_full = _round_up(Din, _LANE)
    if vmem_bytes(dinp_full) <= _VMEM_TILE_BUDGET:
        tk = dinp_full
        single_k = True
    else:
        tk = _choose_tile(Din, _LANE, 1024)
        while vmem_bytes(tk) > _VMEM_TILE_BUDGET and tk > _LANE:
            tk = max(_LANE, tk // 2)
        single_k = False

    Bp = _round_up(B, tm)
    Doutp = _round_up(Dout, tn)
    Dinp = _round_up(Din, tk)

    # ---- wrapper-side layout: transpose + cast (+ pad only if needed) ----
    xp = x.astype(compute_dtype)
    if (Bp, Dinp) != (B, Din):
        xp = jnp.pad(xp, ((0, Bp - B), (0, Dinp - Din)))
    wt = weight.T.astype(compute_dtype)            # (Din, Dout): plain A @ B
    if (Dinp, Doutp) != (Din, Dout):
        wt = jnp.pad(wt, ((0, Dinp - Din), (0, Doutp - Dout)))
    bp = bias.astype(jnp.float32).reshape(1, Dout)
    if Doutp != Dout:
        bp = jnp.pad(bp, ((0, 0), (0, Doutp - Dout)))
    seed_arr = jnp.asarray([seed], dtype=jnp.int32)

    common = dict(dropout_p=float(dropout_p), training=bool(training),
                  use_hw_prng=bool(use_hw_prng), dout_logical=int(Dout),
                  tm=tm, tn=tn)
    cost = pl.CostEstimate(
        flops=2 * Bp * Dinp * Doutp,
        bytes_accessed=(in_bytes * (Bp * Dinp + Dinp * Doutp)
                        + out_bytes * Bp * Doutp + 4 * Doutp),
        transcendentals=0)

    if single_k:
        grid = (Bp // tm, Doutp // tn)
        out = pl.pallas_call(
            functools.partial(_basic_block_kernel_fused, **common),
            out_shape=jax.ShapeDtypeStruct((Bp, Doutp), out_dtype),
            grid=grid,
            in_specs=[
                pl.BlockSpec(memory_space=pltpu.SMEM),              # seed
                pl.BlockSpec((tm, tk), lambda i, j: (i, 0)),        # x
                pl.BlockSpec((tk, tn), lambda i, j: (0, j)),        # W.T
                pl.BlockSpec((1, tn), lambda i, j: (0, j)),         # bias row
            ],
            out_specs=pl.BlockSpec((tm, tn), lambda i, j: (i, j)),
            compiler_params=pltpu.CompilerParams(
                dimension_semantics=("parallel", "parallel"),
                vmem_limit_bytes=_VMEM_LIMIT_BYTES),
            cost_estimate=cost,
        )(seed_arr, xp, wt, bp)
    else:
        grid = (Bp // tm, Doutp // tn, Dinp // tk)
        out = pl.pallas_call(
            functools.partial(_basic_block_kernel_ktiled, **common),
            out_shape=jax.ShapeDtypeStruct((Bp, Doutp), out_dtype),
            grid=grid,
            in_specs=[
                pl.BlockSpec(memory_space=pltpu.SMEM),              # seed
                pl.BlockSpec((tm, tk), lambda i, j, k: (i, k)),     # x
                pl.BlockSpec((tk, tn), lambda i, j, k: (k, j)),     # W.T
                pl.BlockSpec((1, tn), lambda i, j, k: (0, j)),      # bias row
            ],
            out_specs=pl.BlockSpec((tm, tn), lambda i, j, k: (i, j)),
            scratch_shapes=[pltpu.VMEM((tm, tn), jnp.float32)],     # f32 acc
            compiler_params=pltpu.CompilerParams(
                dimension_semantics=("parallel", "parallel", "arbitrary"),
                vmem_limit_bytes=_VMEM_LIMIT_BYTES),
            cost_estimate=cost,
        )(seed_arr, xp, wt, bp)

    if (Bp, Doutp) != (B, Dout):
        out = out[:B, :Dout]
    return out


if __name__ == "__main__":
    key = jax.random.PRNGKey(0)
    k_x, k_w, k_b = jax.random.split(key, 3)

    B, input_dim, output_dim = 8, 32, 64
    dropout_p = 0.25

    x = jax.random.normal(k_x, (B, input_dim), dtype=jnp.float32)
    # PyTorch nn.Linear parameter shapes: W (out, in), b (out,)
    bound = 1.0 / (input_dim ** 0.5)
    weight = jax.random.uniform(k_w, (output_dim, input_dim),
                                minval=-bound, maxval=bound, dtype=jnp.float32)
    bias = jax.random.uniform(k_b, (output_dim,),
                              minval=-bound, maxval=bound, dtype=jnp.float32)

    # Training mode (dropout active), default bf16 MXU inputs / f32 accumulate.
    out = basic_block(x, weight, bias, dropout_p=dropout_p, training=True, seed=0)
    out = jax.block_until_ready(out)
    assert out.shape == (B, output_dim)
    assert bool(jnp.all(out >= 0.0))                 # ReLU post-condition

    ref = jnp.maximum(x @ weight.T + bias, 0.0)

    # Eval mode, exact numerics (f32 MXU inputs) vs Linear + ReLU reference.
    out_eval_f32 = basic_block(x, weight, bias, dropout_p=dropout_p,
                               training=False, compute_dtype=jnp.float32)
    assert jnp.allclose(jax.block_until_ready(out_eval_f32), ref,
                        atol=1e-5, rtol=1e-5)

    # Eval mode with default bf16 inputs (only input-cast rounding differs).
    out_eval = basic_block(x, weight, bias, dropout_p=dropout_p, training=False)
    assert jnp.allclose(jax.block_until_ready(out_eval), ref,
                        atol=5e-2, rtol=5e-2)

    print("KERNEL_OK")
</pallas_src>

<mosaic_0001>
module attributes {stable_mosaic.version = 11 : i64} {
  func.func @_basic_block_kernel_fused(%arg0: i32, %arg1: i32, %arg2: memref<1xi32, #tpu.memory_space<smem>>, %arg3: memref<8x128xbf16, #tpu.memory_space<vmem>>, %arg4: memref<128x128xbf16, #tpu.memory_space<vmem>>, %arg5: memref<1x128xf32, #tpu.memory_space<vmem>>, %arg6: memref<8x128xf32, #tpu.memory_space<vmem>>) attributes {dimension_semantics = [#tpu.dimension_semantics<parallel>, #tpu.dimension_semantics<parallel>], iteration_bounds = array<i64: 1, 1>, scalar_prefetch = 0 : i64, scratch_operands = 0 : i64, tpu.core_type = #tpu.core_type<tc>, window_params = [{transform_indices = @transform_0, window_bounds = array<i64: 1>}, {transform_indices = @transform_1, window_bounds = array<i64: 8, 128>}, {transform_indices = @transform_2, window_bounds = array<i64: 128, 128>}, {transform_indices = @transform_3, window_bounds = array<i64: 1, 128>}, {transform_indices = @transform_4, window_bounds = array<i64: 8, 128>}]} {
    %c8_i32 = arith.constant 8 : i32
    %0 = arith.muli %arg0, %c8_i32 : i32
    %c128_i32 = arith.constant 128 : i32
    %1 = arith.muli %arg1, %c128_i32 : i32
    %c0 = arith.constant 0 : index
    %c0_0 = arith.constant 0 : index
    %2 = vector.load %arg3[%c0, %c0_0] : memref<8x128xbf16, #tpu.memory_space<vmem>>, vector<8x128xbf16>
    %c0_1 = arith.constant 0 : index
    %c0_2 = arith.constant 0 : index
    %3 = vector.load %arg4[%c0_1, %c0_2] : memref<128x128xbf16, #tpu.memory_space<vmem>>, vector<128x128xbf16>
    %cst = arith.constant dense<0.000000e+00> : vector<8x128xf32>
    %4 = tpu.matmul %2, %3, %cst {dimension_numbers = #tpu.dot_dimension_numbers<[1], [0], [0], [1], [0, 0, 1, 1], [], []>} : vector<8x128xbf16>, vector<128x128xbf16>, vector<8x128xf32> -> vector<8x128xf32>
    %c0_3 = arith.constant 0 : index
    %c0_4 = arith.constant 0 : index
    %5 = vector.load %arg5[%c0_3, %c0_4] : memref<1x128xf32, #tpu.memory_space<vmem>>, vector<1x128xf32>
    %6 = vector.broadcast %5 : vector<1x128xf32> to vector<8x128xf32>
    %7 = arith.addf %4, %6 : vector<8x128xf32>
    %8 = tpu.iota {dimensions = array<i32: 0>} : vector<8x128xi32>
    %9 = vector.broadcast %0 : i32 to vector<8x128xi32>
    %10 = arith.addi %8, %9 : vector<8x128xi32>
    %11 = tpu.iota {dimensions = array<i32: 1>} : vector<8x128xi32>
    %12 = vector.broadcast %1 : i32 to vector<8x128xi32>
    %13 = arith.addi %11, %12 : vector<8x128xi32>
    %c64_i32 = arith.constant 64 : i32
    %14 = vector.broadcast %c64_i32 : i32 to vector<8x128xi32>
    %15 = arith.muli %10, %14 : vector<8x128xi32>
    %16 = arith.addi %15, %13 : vector<8x128xi32>
    %c-1640531527_i32 = arith.constant -1640531527 : i32
    %17 = vector.broadcast %c-1640531527_i32 : i32 to vector<8x128xi32>
    %18 = arith.muli %16, %17 : vector<8x128xi32>
    %c0_5 = arith.constant 0 : index
    %19 = memref.load %arg2[%c0_5] : memref<1xi32, #tpu.memory_space<smem>>
    %20 = vector.broadcast %19 : i32 to vector<8x128xi32>
    %21 = arith.addi %18, %20 : vector<8x128xi32>
    %c16_i32 = arith.constant 16 : i32
    %22 = vector.broadcast %c16_i32 : i32 to vector<8x128xi32>
    %23 = arith.shrui %21, %22 : vector<8x128xi32>
    %24 = arith.xori %21, %23 : vector<8x128xi32>
    %c2146121005_i32 = arith.constant 2146121005 : i32
    %25 = vector.broadcast %c2146121005_i32 : i32 to vector<8x128xi32>
    %26 = arith.muli %24, %25 : vector<8x128xi32>
    %c15_i32 = arith.constant 15 : i32
    %27 = vector.broadcast %c15_i32 : i32 to vector<8x128xi32>
    %28 = arith.shrui %26, %27 : vector<8x128xi32>
    %29 = arith.xori %26, %28 : vector<8x128xi32>
    %c-2073254261_i32 = arith.constant -2073254261 : i32
    %30 = vector.broadcast %c-2073254261_i32 : i32 to vector<8x128xi32>
    %31 = arith.muli %29, %30 : vector<8x128xi32>
    %c16_i32_6 = arith.constant 16 : i32
    %32 = vector.broadcast %c16_i32_6 : i32 to vector<8x128xi32>
    %33 = arith.shrui %31, %32 : vector<8x128xi32>
    %34 = arith.xori %31, %33 : vector<8x128xi32>
    %c1073741824_i32 = arith.constant 1073741824 : i32
    %35 = vector.broadcast %c1073741824_i32 : i32 to vector<8x128xi32>
    %36 = arith.cmpi uge, %34, %35 : vector<8x128xi32>
    %cst_7 = arith.constant 1.33333337 : f32
    %37 = vector.broadcast %cst_7 : f32 to vector<8x128xf32>
    %38 = arith.mulf %7, %37 : vector<8x128xf32>
    %cst_8 = arith.constant 0.000000e+00 : f32
    %39 = vector.broadcast %cst_8 : f32 to vector<8x128xf32>
    %40 = arith.select %36, %38, %39 : vector<8x128xi1>, vector<8x128xf32>
    %cst_9 = arith.constant 0.000000e+00 : f32
    %41 = vector.broadcast %cst_9 : f32 to vector<8x128xf32>
    %42 = arith.maximumf %40, %41 : vector<8x128xf32>
    %c0_10 = arith.constant 0 : index
    %c0_11 = arith.constant 0 : index
    %43 = vector.load %arg6[%c0_10, %c0_11] : memref<8x128xf32, #tpu.memory_space<vmem>>, vector<8x128xf32>
    tpu.vector_store %arg6[%c0_10, %c0_11], %42 {strides = array<i32>} : memref<8x128xf32, #tpu.memory_space<vmem>>, vector<8x128xf32>,
    return
  }
  func.func @transform_0(%arg0: i32, %arg1: i32) -> i32 {
    %c0_i32 = arith.constant 0 : i32
    %c0_i32_0 = arith.constant 0 : i32
    return %c0_i32 : i32
  }
  func.func @transform_1(%arg0: i32, %arg1: i32) -> (i32, i32) {
    %c0_i32 = arith.constant 0 : i32
    %c0_i32_0 = arith.constant 0 : i32
    return %arg0, %c0_i32 : i32, i32
  }
  func.func @transform_2(%arg0: i32, %arg1: i32) -> (i32, i32) {
    %c0_i32 = arith.constant 0 : i32
    %c0_i32_0 = arith.constant 0 : i32
    return %c0_i32, %arg1 : i32, i32
  }
  func.func @transform_3(%arg0: i32, %arg1: i32) -> (i32, i32) {
    %c0_i32 = arith.constant 0 : i32
    %c0_i32_0 = arith.constant 0 : i32
    return %c0_i32, %arg1 : i32, i32
  }
  func.func @transform_4(%arg0: i32, %arg1: i32) -> (i32, i32) {
    %c0_i32 = arith.constant 0 : i32
    return %arg0, %arg1 : i32, i32
  }
}

</mosaic_0001>

<llo_original>
// kernel: tpu_custom_call.1
$region0: #{tpu_custom_call.1}
  #allocation0 [shape = 'u32[]', space=smem, size = 0x4, offset = 0x4, fixed_abs, tag = 'smem constant byte address 0x4 - core index']
  #allocation1 [shape = 'u32[144,128]{1,0:T(1,128)}', space=vmem, size = 0x12000, scoped, tag = 'internal scratch']
  #allocation2 [shape = 's32[1]{0:T(128)S(6)}', space=smem, size = 0x200, scoped, tag = 'scoped memory for tpu_custom_call.1']
  %s0 = inlined_call_operand.<no memory space> [shape: s32[1], index: 0, kind: input, shape index: {}]
  %s1 = inlined_call_operand.hbm [shape: bf16[8,128], index: 1, kind: input, shape index: {}]
  %s2 = inlined_call_operand.hbm [shape: bf16[128,128], index: 2, kind: input, shape index: {}]
  %s3 = inlined_call_operand.vmem [shape: f32[1,128], index: 3, kind: input, shape index: {}]
  %s4 = inlined_call_operand.hbm [shape: f32[8,128], index: 4, kind: output, shape index: {}]
  %s5 = sld [smem:[#allocation0]]
  $region34: #{tpu_custom_call.1} parent=0
    _
  %s7 = ssub.s32 1, %s5
  %s8 = scalar_select 0, %s7, %s5
  %9 = sst [smem:[#allocation2]] %s0
  $region1: #{tpu_custom_call.1} parent=0
    #allocation3 [shape = 'u8[2048]{0}', space=vmem, size = 0x800, scoped, tag = 'input window, operand 1, single buffered']
    #allocation4 [shape = 's32[1]{0}', space=sflag, size = 0x4, scoped, tag = 'scoped memory for tpu_custom_call.1']
    #allocation5 [shape = 's32[1]{0}', space=sflag, size = 0x4, scoped, tag = 'scoped memory for tpu_custom_call.1']
    #allocation6 [shape = 'u8[32768]{0}', space=vmem, size = 0x8000, scoped, tag = 'input window, operand 2, single buffered']
    #allocation7 [shape = 's32[1]{0}', space=sflag, size = 0x4, scoped, tag = 'scoped memory for tpu_custom_call.1']
    #allocation8 [shape = 'u8[4096]{0}', space=vmem, size = 0x1000, scoped, tag = 'output window, operand 0, single buffered']
    %10 = vsyncpa [#allocation4], 0
    %11 = vsyncpa [#allocation7], 0
    %12 = vsyncpa [#allocation5], 0
    // Predicated region
    $region2: #{tpu_custom_call.1} parent=1 // pred_check
      _
    $region3: #{tpu_custom_call.1} parent=1 // pred_check_branch
      %14 = sbr.rel (0) target = $region5
    $region4: #{tpu_custom_call.1} parent=1 // pred_region
      _
    $region5: #{tpu_custom_call.1} parent=1 // pred_fallthru
      _
    // Predicated region
    $region6: #{tpu_custom_call.1} parent=1 // pred_check
      _
    $region7: #{tpu_custom_call.1} parent=1 // pred_check_branch
      %16 = sbr.rel (0) target = $region9
    $region8: #{tpu_custom_call.1} parent=1 // pred_region
      %s18 = ssub.s32 64, 64
      %19 = vsyncadd [#allocation4], %s18
      %s21 = sshll.u32 [#allocation3], 4
      %s22 = int_to_ptr.vmem [resolvable:$true] %s21
      %24 = dma.hbm_to_vmem [thread:$0]  %s1, 64, %s22, [#allocation4]
    $region9: #{tpu_custom_call.1} parent=1 // pred_fallthru
      _
    // Predicated region
    $region10: #{tpu_custom_call.1} parent=1 // pred_check
      _
    $region11: #{tpu_custom_call.1} parent=1 // pred_check_branch
      %26 = sbr.rel (0) target = $region13
    $region12: #{tpu_custom_call.1} parent=1 // pred_region
      %s28 = ssub.s32 1024, 1024
      %29 = vsyncadd [#allocation7], %s28
      %s30 = sshll.u32 [#allocation6], 4
      %s31 = int_to_ptr.vmem [resolvable:$true] %s30
      %36 = dma.hbm_to_vmem [thread:$0]  %s2, 1024, %s31, [#allocation7], 64, 64, 4
    $region13: #{tpu_custom_call.1} parent=1 // pred_fallthru
      _
    // Predicated region
    $region14: #{tpu_custom_call.1} parent=1 // pred_check
      _
    $region15: #{tpu_custom_call.1} parent=1 // pred_check_branch
      %38 = sbr.rel (0) target = $region17
    $region16: #{tpu_custom_call.1} parent=1 // pred_region
      _
    $region17: #{tpu_custom_call.1} parent=1 // pred_fallthru
      _
    // Predicated region
    $region18: #{tpu_custom_call.1} parent=1 // pred_check
      _
    $region19: #{tpu_custom_call.1} parent=1 // pred_check_branch
      %40 = sbr.rel (0) target = $region21
    $region20: #{tpu_custom_call.1} parent=1 // pred_region
      %41 = dma.done [#allocation4], 64
    $region21: #{tpu_custom_call.1} parent=1 // pred_fallthru
      _
    // Predicated region
    $region22: #{tpu_custom_call.1} parent=1 // pred_check
      _
    $region23: #{tpu_custom_call.1} parent=1 // pred_check_branch
      %43 = sbr.rel (0) target = $region25
    $region24: #{tpu_custom_call.1} parent=1 // pred_region
      %44 = dma.done [#allocation7], 1024
    $region25: #{tpu_custom_call.1} parent=1 // pred_fallthru
      _
    %s46 = smul.u32 0, 8
    %s47 = smul.u32 0, 128
    %v48 = vld [vmem:[#allocation3] sm:$0xf]
    %v49 = vld [vmem:[#allocation6] sm:$0xf]
    %v50 = vld [vmem:[#allocation6 + $0x4] sm:$0xf]
    %v51 = vld [vmem:[#allocation6 + $0x8] sm:$0xf]
    %v52 = vld [vmem:[#allocation6 + $0xc] sm:$0xf]
    %v53 = vld [vmem:[#allocation6 + $0x10] sm:$0xf]
    %v54 = vld [vmem:[#allocation6 + $0x14] sm:$0xf]
    %v55 = vld [vmem:[#allocation6 + $0x18] sm:$0xf]
    %v56 = vld [vmem:[#allocation6 + $0x1c] sm:$0xf]
    %v57 = vld [vmem:[#allocation6 + $0x20] sm:$0xf]
    %v58 = vld [vmem:[#allocation6 + $0x24] sm:$0xf]
    %v59 = vld [vmem:[#allocation6 + $0x28] sm:$0xf]
    %v60 = vld [vmem:[#allocation6 + $0x2c] sm:$0xf]
    %v61 = vld [vmem:[#allocation6 + $0x30] sm:$0xf]
    %v62 = vld [vmem:[#allocation6 + $0x34] sm:$0xf]
    %v63 = vld [vmem:[#allocation6 + $0x38] sm:$0xf]
    %v64 = vld [vmem:[#allocation6 + $0x3c] sm:$0xf]
    %v65 = vld [vmem:[%s3] sm:$0x1]
    %v67 = vlaneseq
    %v68 = vshrl.u32 %v67, 7
    %v69 = vsub.s32 0, %v68
    %v70 = vrot.slane %v65, %v69
    %v88 = vunpack.c.l.b16 %v49
    %v89 = vunpack.c.l.b16 %v50
    %v90 = vunpack.c.l.b16 %v51
    %v91 = vunpack.c.l.b16 %v52
    %v92 = vunpack.c.l.b16 %v53
    %v93 = vunpack.c.l.b16 %v54
    %v94 = vunpack.c.l.b16 %v55
    %v95 = vunpack.c.l.b16 %v56
    %v96 = vunpack.c.l.b16 %v57
    %v97 = vunpack.c.l.b16 %v58
    %v98 = vunpack.c.l.b16 %v59
    %v99 = vunpack.c.l.b16 %v60
    %v100 = vunpack.c.l.b16 %v61
    %v101 = vunpack.c.l.b16 %v62
    %v102 = vunpack.c.l.b16 %v63
    %v103 = vunpack.c.l.b16 %v64
    %v104 = vpack.c.b16 %v89, %v88
    %v105 = vpack.c.b16 %v91, %v90
    %v106 = vpack.c.b16 %v93, %v92
    %v107 = vpack.c.b16 %v95, %v94
    %v108 = vpack.c.b16 %v97, %v96
    %v109 = vpack.c.b16 %v99, %v98
    %v110 = vpack.c.b16 %v101, %v100
    %v111 = vpack.c.b16 %v103, %v102
    %120 = vmatprep.subr.bf16.mxu0 0
    %121 = vmatpush1.bf16.msra.mxu0 %v111
    %122 = vmatprep.subr.bf16.mxu0 0
    %123 = vmatpush1.bf16.msra.mxu0 %v110
    %124 = vmatprep.subr.bf16.mxu0 0
    %125 = vmatpush1.bf16.msra.mxu0 %v109
    %126 = vmatprep.subr.bf16.mxu0 0
    %127 = vmatpush1.bf16.msra.mxu0 %v108
    %128 = vmatprep.subr.bf16.mxu0 0
    %129 = vmatpush1.bf16.msra.mxu0 %v107
    %130 = vmatprep.subr.bf16.mxu0 0
    %131 = vmatpush1.bf16.msra.mxu0 %v106
    %132 = vmatprep.subr.bf16.mxu0 0
    %133 = vmatpush1.bf16.msra.mxu0 %v105
    %134 = vmatprep.subr.bf16.mxu0 0
    %135 = vmatpush1.bf16.msra.mxu0 %v104
    %136 = vmatprep.subr.bf16.mxu0 0
    %137 = vmatpush2.bf16.msra.mxu0 0
    %138 = vmatprep.subr.bf16.mxu0 0
    %139 = vmatpush2.bf16.msra.mxu0 0
    %140 = vmatprep.subr.bf16.mxu0 0
    %141 = vmatpush2.bf16.msra.mxu0 0
    %142 = vmatprep.subr.bf16.mxu0 0
    %143 = vmatpush2.bf16.msra.mxu0 0
    %144 = vmatprep.subr.bf16.mxu0 0
    %145 = vmatpush2.bf16.msra.mxu0 0
    %146 = vmatprep.subr.bf16.mxu0 0
    %147 = vmatpush2.bf16.msra.mxu0 0
    %148 = vmatprep.subr.bf16.mxu0 0
    %149 = vmatpush2.bf16.msra.mxu0 0
    %150 = vmatprep.subr.bf16.mxu0 0
    %151 = vmatpush2.bf16.msra.mxu0 0
    %152 = vmatprep.mubr.bf16.mxu0 0
    %153 = vmatmul.mubr.bf16.gmra.mxu0 %v48
    %v154 = vpop.f32.mrf.mxu0
    %v155 = vadd.f32 %v70, %v154
    %v156 = vpop.f32.mrf.mxu0
    %v157 = vpop.f32.mrf.mxu0
    %v158 = vpop.f32.mrf.mxu0
    %159 = vdwg.mxu0
    %v160 = vlaneseq
    %v161 = vshrl.u32 %v160, 7
    %v162 = vstv %s46
    %v163 = vadd.s32 %v161, %v162
    %v164 = vlaneseq
    %v165 = vand.u32 %v164, 127
    %v166 = vstv %s47
    %v167 = vadd.s32 %v165, %v166
    %v168 = vmul.u32 %v163, 64
    %v169 = vadd.s32 %v168, %v167
    %v170 = vmul.u32 %v169, 2654435769
    %s171 = sld [smem:[#allocation2]]
    %v172 = vstv %s171
    %v173 = vadd.s32 %v170, %v172
    %v174 = vshrl.u32 %v173, 16
    %v175 = vxor.u32 %v173, %v174
    %v176 = vmul.u32 %v175, 2146121005
    %v177 = vshrl.u32 %v176, 15
    %v178 = vxor.u32 %v176, %v177
    %v179 = vmul.u32 %v178, 2221713035
    %v180 = vshrl.u32 %v179, 16
    %v181 = vxor.u32 %v179, %v180
    %vm182 = vcmp.ge.u32.totalorder %v181, 1073741824
    %v183 = vmul.f32 %v155, 1.3333334
    %v184 = vsel %vm182, %v183, 0.0
    %v185 = vmax.f32 %v184, 0.0
    %186 = vst [vmem:[#allocation8] sm:$0xff] %v185
    // Predicated region
    $region26: #{tpu_custom_call.1} parent=1 // pred_check
      _
    $region27: #{tpu_custom_call.1} parent=1 // pred_check_branch
      %188 = sbr.rel (0) target = $region29
    $region28: #{tpu_custom_call.1} parent=1 // pred_region
      %s190 = ssub.s32 128, 128
      %191 = vsyncadd [#allocation5], %s190
      %s193 = sshll.u32 [#allocation8], 4
      %s194 = int_to_ptr.vmem [resolvable:$true] %s193
      %196 = dma.vmem_to_hbm [thread:$0]  %s194, 128, %s4, [#allocation5]
    $region29: #{tpu_custom_call.1} parent=1 // pred_fallthru
      _
    // Predicated region
    $region30: #{tpu_custom_call.1} parent=1 // pred_check
      _
    $region31: #{tpu_custom_call.1} parent=1 // pred_check_branch
      %198 = sbr.rel (0) target = $region33
    $region32: #{tpu_custom_call.1} parent=1 // pred_region
      %199 = dma.done [#allocation5], 128
    $region33: #{tpu_custom_call.1} parent=1 // pred_fallthru
      _
    %200 = vsyncpa [#allocation4], 1
    %201 = vsyncpa [#allocation7], 1
    %202 = vsyncpa [#allocation5], 1

</llo_original>
